<compile_context>
chip_gen: v7x
topology: tpu7x:2x2x1
jax: 0.10.0
libtpu: 0.0.40
codegen_flags: <defaults>
</compile_context>

<pallas_src>
import jax
import jax.numpy as jnp
from jax.experimental import pallas as pl
from jax.experimental.pallas import tpu as pltpu

EPS = 1e-5

# Tile candidates (largest-first).  ~512x1024 f32 = 2 MiB per buffer keeps the
# double-buffered input+output well inside scoped VMEM on v5e (16 MiB default,
# we raise to 32 MiB), v6e (32 MiB) and v7x (32 MiB of 64 MiB physical).
_ROW_TILES = (512, 256, 128, 64, 32, 16, 8)
_LANE_TILES = (1024, 512, 256, 128)
_VMEM_LIMIT = 32 * 1024 * 1024


def _pick_tile(total, candidates):
    for c in candidates:
        if total % c == 0:
            return c
    return total  # full-extent block is always a legal block dim


def _row_stats_kernel(x_ref, sum_ref, sq_ref):
    """Accumulate per-row sum / sum-of-squares over the lane (spatial) axis."""
    @pl.when(pl.program_id(1) == 0)
    def _():
        sum_ref[...] = jnp.zeros_like(sum_ref)
        sq_ref[...] = jnp.zeros_like(sq_ref)

    x = x_ref[...].astype(jnp.float32)
    sum_ref[...] += jnp.sum(x, axis=1, keepdims=True)
    sq_ref[...] += jnp.sum(x * x, axis=1, keepdims=True)


def _normalize_kernel(x_ref, scale_ref, shift_ref, o_ref):
    """out = x * scale + shift  (scale/shift are per-row, broadcast on lanes)."""
    x = x_ref[...].astype(jnp.float32)
    o_ref[...] = (x * scale_ref[...] + shift_ref[...]).astype(o_ref.dtype)


def conditional_batch_norm_2d(x_nchw, y, embed_weight):
    """x_nchw: [N, C, H, W]; y: [N] int32; embed_weight: [num_classes, 2C]."""
    N, C, H, W = x_nchw.shape
    R, HW = N * C, H * W

    # Zero-cost view: NCHW is contiguous, so [N*C, H*W] is the same bytes.
    x2 = x_nchw.reshape(R, HW)

    tr = _pick_tile(R, _ROW_TILES)
    thw = _pick_tile(HW, _LANE_TILES)
    grid = (R // tr, HW // thw)

    # ---- pass 1: per-(n,c) partial sums (lane-axis reduction, accumulator
    # resident across the 'arbitrary' lane-tile axis) ------------------------
    row_sum, row_sq = pl.pallas_call(
        _row_stats_kernel,
        out_shape=(
            jax.ShapeDtypeStruct((R, 1), jnp.float32),
            jax.ShapeDtypeStruct((R, 1), jnp.float32),
        ),
        grid=grid,
        in_specs=[pl.BlockSpec((tr, thw), lambda i, j: (i, j))],
        out_specs=(
            pl.BlockSpec((tr, 1), lambda i, j: (i, 0)),
            pl.BlockSpec((tr, 1), lambda i, j: (i, 0)),
        ),
        compiler_params=pltpu.CompilerParams(
            dimension_semantics=("parallel", "arbitrary"),
            vmem_limit_bytes=_VMEM_LIMIT,
        ),
    )(x2)

    # ---- tiny [N, C]-sized glue: batch-norm stats + conditional affine ------
    # (negligible HBM traffic; the embedding gather is an [N, 2C] lookup and is
    #  deliberately left to XLA rather than fused via scalar prefetch.)
    inv_count = jnp.float32(1.0 / (N * HW))
    ch_sum = row_sum.reshape(N, C).sum(axis=0)            # [C]
    ch_sq = row_sq.reshape(N, C).sum(axis=0)              # [C]
    mean = ch_sum * inv_count
    # Biased (training-mode) variance via E[x^2] - mean^2; accumulation is f32.
    # TODO(synk): for large-mean inputs, subtract a per-tile offset to avoid
    # catastrophic cancellation in this one-read variance formula.
    var = ch_sq * inv_count - mean * mean
    inv_std = jax.lax.rsqrt(var + EPS)                    # [C]

    emb = embed_weight[y].astype(jnp.float32)             # [N, 2C]
    gamma = emb[:, :C]                                    # [N, C]
    beta = emb[:, C:]                                     # [N, C]
    scale = (gamma * inv_std[None, :]).reshape(R, 1)                      # per (n,c)
    shift = (beta - gamma * (mean * inv_std)[None, :]).reshape(R, 1)      # per (n,c)

    # ---- pass 2: lane-dense fused normalize + affine ------------------------
    out2 = pl.pallas_call(
        _normalize_kernel,
        out_shape=jax.ShapeDtypeStruct((R, HW), x_nchw.dtype),
        grid=grid,
        in_specs=[
            pl.BlockSpec((tr, thw), lambda i, j: (i, j)),
            pl.BlockSpec((tr, 1), lambda i, j: (i, 0)),
            pl.BlockSpec((tr, 1), lambda i, j: (i, 0)),
        ],
        out_specs=pl.BlockSpec((tr, thw), lambda i, j: (i, j)),
        compiler_params=pltpu.CompilerParams(
            dimension_semantics=("parallel", "parallel"),
            vmem_limit_bytes=_VMEM_LIMIT,
        ),
    )(x2, scale, shift)

    # Zero-cost view back to NCHW.
    return out2.reshape(N, C, H, W)


def _reference(x_nchw, y, embed_weight):
    """Pure-JAX reference of the PyTorch forward (training-mode BN)."""
    N, C, H, W = x_nchw.shape
    mean = jnp.mean(x_nchw, axis=(0, 2, 3), keepdims=True)
    var = jnp.mean((x_nchw - mean) ** 2, axis=(0, 2, 3), keepdims=True)
    x_hat = (x_nchw - mean) / jnp.sqrt(var + EPS)
    emb = embed_weight[y]
    gamma = emb[:, :C].reshape(N, C, 1, 1)
    beta = emb[:, C:].reshape(N, C, 1, 1)
    return gamma * x_hat + beta


if __name__ == "__main__":
    num_features = 4       # C
    num_classes = 10
    N, H, W = 2, 16, 16

    key = jax.random.PRNGKey(0)
    k_x, k_y, k_emb = jax.random.split(key, 3)

    # Deterministic parameter init mirroring the PyTorch module __init__:
    # embed.weight[:, :C] ~ Normal(1, 0.02); embed.weight[:, C:] = 0.
    gamma_part = 1.0 + 0.02 * jax.random.normal(
        k_emb, (num_classes, num_features), dtype=jnp.float32)
    beta_part = jnp.zeros((num_classes, num_features), dtype=jnp.float32)
    embed_weight = jnp.concatenate([gamma_part, beta_part], axis=1)

    x = jax.random.normal(k_x, (N, num_features, H, W), dtype=jnp.float32)
    y = jax.random.randint(k_y, (N,), 0, num_classes, dtype=jnp.int32)

    out = conditional_batch_norm_2d(x, y, embed_weight)
    out = jax.block_until_ready(out)

    ref = _reference(x, y, embed_weight)
    assert out.shape == (N, num_features, H, W)
    assert jnp.allclose(out, ref, atol=1e-4, rtol=1e-4)

    print("KERNEL_OK")
</pallas_src>

<mosaic_0001>
module attributes {stable_mosaic.version = 11 : i64} {
  func.func @_row_stats_kernel(%arg0: i32, %arg1: i32, %arg2: memref<8x256xf32, #tpu.memory_space<vmem>>, %arg3: memref<8x1xf32, #tpu.memory_space<vmem>>, %arg4: memref<8x1xf32, #tpu.memory_space<vmem>>) attributes {dimension_semantics = [#tpu.dimension_semantics<parallel>, #tpu.dimension_semantics<arbitrary>], iteration_bounds = array<i64: 1, 1>, scalar_prefetch = 0 : i64, scratch_operands = 0 : i64, tpu.core_type = #tpu.core_type<tc>, window_params = [{transform_indices = @transform_0, window_bounds = array<i64: 8, 256>}, {transform_indices = @transform_1, window_bounds = array<i64: 8, 1>}, {transform_indices = @transform_2, window_bounds = array<i64: 8, 1>}]} {
    %c0_i32 = arith.constant 0 : i32
    %0 = arith.cmpi eq, %arg1, %c0_i32 : i32
    %1 = arith.extui %0 : i1 to i32
    %c0_i32_0 = arith.constant 0 : i32
    %2 = arith.cmpi ne, %1, %c0_i32_0 : i32
    scf.if %2 {
      %cst_11 = arith.constant 0.000000e+00 : f32
      %15 = vector.broadcast %cst_11 : f32 to vector<8x1xf32>
      %c0_12 = arith.constant 0 : index
      %c0_13 = arith.constant 0 : index
      %16 = vector.load %arg3[%c0_12, %c0_13] : memref<8x1xf32, #tpu.memory_space<vmem>>, vector<8x1xf32>
      tpu.vector_store %arg3[%c0_12, %c0_13], %15 {strides = array<i32>} : memref<8x1xf32, #tpu.memory_space<vmem>>, vector<8x1xf32>,
      %cst_14 = arith.constant 0.000000e+00 : f32
      %17 = vector.broadcast %cst_14 : f32 to vector<8x1xf32>
      %c0_15 = arith.constant 0 : index
      %c0_16 = arith.constant 0 : index
      %18 = vector.load %arg4[%c0_15, %c0_16] : memref<8x1xf32, #tpu.memory_space<vmem>>, vector<8x1xf32>
      tpu.vector_store %arg4[%c0_15, %c0_16], %17 {strides = array<i32>} : memref<8x1xf32, #tpu.memory_space<vmem>>, vector<8x1xf32>,
    } else {
    }
    %c0 = arith.constant 0 : index
    %c0_1 = arith.constant 0 : index
    %3 = vector.load %arg2[%c0, %c0_1] : memref<8x256xf32, #tpu.memory_space<vmem>>, vector<8x256xf32>
    %c0_2 = arith.constant 0 : index
    %c0_3 = arith.constant 0 : index
    %4 = vector.load %arg3[%c0_2, %c0_3] : memref<8x1xf32, #tpu.memory_space<vmem>>, vector<8x1xf32>
    %cst = arith.constant dense<0.000000e+00> : vector<8xf32>
    %5 = vector.multi_reduction <add>, %3, %cst [1] : vector<8x256xf32> to vector<8xf32>
    %6 = vector.shape_cast %5 : vector<8xf32> to vector<8x1xf32>
    %7 = arith.addf %4, %6 : vector<8x1xf32>
    %c0_4 = arith.constant 0 : index
    %c0_5 = arith.constant 0 : index
    %8 = vector.load %arg3[%c0_4, %c0_5] : memref<8x1xf32, #tpu.memory_space<vmem>>, vector<8x1xf32>
    tpu.vector_store %arg3[%c0_4, %c0_5], %7 {strides = array<i32>} : memref<8x1xf32, #tpu.memory_space<vmem>>, vector<8x1xf32>,
    %c0_6 = arith.constant 0 : index
    %c0_7 = arith.constant 0 : index
    %9 = vector.load %arg4[%c0_6, %c0_7] : memref<8x1xf32, #tpu.memory_space<vmem>>, vector<8x1xf32>
    %10 = arith.mulf %3, %3 : vector<8x256xf32>
    %cst_8 = arith.constant dense<0.000000e+00> : vector<8xf32>
    %11 = vector.multi_reduction <add>, %10, %cst_8 [1] : vector<8x256xf32> to vector<8xf32>
    %12 = vector.shape_cast %11 : vector<8xf32> to vector<8x1xf32>
    %13 = arith.addf %9, %12 : vector<8x1xf32>
    %c0_9 = arith.constant 0 : index
    %c0_10 = arith.constant 0 : index
    %14 = vector.load %arg4[%c0_9, %c0_10] : memref<8x1xf32, #tpu.memory_space<vmem>>, vector<8x1xf32>
    tpu.vector_store %arg4[%c0_9, %c0_10], %13 {strides = array<i32>} : memref<8x1xf32, #tpu.memory_space<vmem>>, vector<8x1xf32>,
    return
  }
  func.func @transform_0(%arg0: i32, %arg1: i32) -> (i32, i32) {
    %c0_i32 = arith.constant 0 : i32
    return %arg0, %arg1 : i32, i32
  }
  func.func @transform_1(%arg0: i32, %arg1: i32) -> (i32, i32) {
    %c0_i32 = arith.constant 0 : i32
    %c0_i32_0 = arith.constant 0 : i32
    return %arg0, %c0_i32 : i32, i32
  }
  func.func @transform_2(%arg0: i32, %arg1: i32) -> (i32, i32) {
    %c0_i32 = arith.constant 0 : i32
    %c0_i32_0 = arith.constant 0 : i32
    return %arg0, %c0_i32 : i32, i32
  }
}

</mosaic_0001>

<llo_original>
// kernel: tpu_custom_call.1
$region0: #{tpu_custom_call.1}
  #allocation0 [shape = 'u32[]', space=smem, size = 0x4, offset = 0x4, fixed_abs, tag = 'smem constant byte address 0x4 - core index']
  #allocation1 [shape = 'u32[144,128]{1,0:T(1,128)}', space=vmem, size = 0x12000, scoped, tag = 'internal scratch']
  %s0 = inlined_call_operand.hbm [shape: f32[8,256], index: 0, kind: input, shape index: {}]
  %s1 = inlined_call_operand.vmem [shape: f32[8,1], index: 1, kind: output, shape index: {0}]
  %s2 = inlined_call_operand.vmem [shape: f32[8,1], index: 2, kind: output, shape index: {1}]
  %3 = xla_tuple %s1, %s2
  %s4 = sld [smem:[#allocation0]]
  $region30: #{tpu_custom_call.1} parent=0
    _
  %s6 = ssub.s32 1, %s4
  %s7 = scalar_select 0, %s6, %s4
  $region1: #{tpu_custom_call.1} parent=0
    #allocation2 [shape = 'u8[8192]{0}', space=vmem, size = 0x2000, scoped, tag = 'input window, operand 0, single buffered']
    #allocation3 [shape = 's32[1]{0}', space=sflag, size = 0x4, scoped, tag = 'scoped memory for tpu_custom_call.1']
    %8 = vsyncpa [#allocation3], 0
    // Predicated region
    $region2: #{tpu_custom_call.1} parent=1 // pred_check
      _
    $region3: #{tpu_custom_call.1} parent=1 // pred_check_branch
      %10 = sbr.rel (0) target = $region5
    $region4: #{tpu_custom_call.1} parent=1 // pred_region
      %s12 = ssub.s32 256, 256
      %13 = vsyncadd [#allocation3], %s12
      %s15 = sshll.u32 [#allocation2], 4
      %s16 = int_to_ptr.vmem [resolvable:$true] %s15
      %18 = dma.hbm_to_vmem [thread:$0]  %s0, 256, %s16, [#allocation3]
    $region5: #{tpu_custom_call.1} parent=1 // pred_fallthru
      _
    // Predicated region
    $region6: #{tpu_custom_call.1} parent=1 // pred_check
      _
    $region7: #{tpu_custom_call.1} parent=1 // pred_check_branch
      %20 = sbr.rel (0) target = $region9
    $region8: #{tpu_custom_call.1} parent=1 // pred_region
      %21 = dma.done [#allocation3], 256
    $region9: #{tpu_custom_call.1} parent=1 // pred_fallthru
      _
    %p22 = scmp.eq.s32.totalorder 0, 0
    // Predicated region
    $region10: #{tpu_custom_call.1} parent=1 // pred_check
      %p23 = pneg %p22
    $region11: #{tpu_custom_call.1} parent=1 // pred_check_branch
      %25 = sbr.rel (%p23) target = $region13
    $region12: #{tpu_custom_call.1} parent=1 // pred_region
      %vm26 = vcmask 7168
      %27 = vst.msk [vmem:[%s1] sm:$0xff] %vm26, 0.0
      %28 = vst.msk [vmem:[%s2] sm:$0xff] %vm26, 0.0
    $region13: #{tpu_custom_call.1} parent=1 // pred_fallthru
      _
    %v29 = vld [vmem:[#allocation2] sm:$0xff]
    %v30 = vld [vmem:[#allocation2 + $0x8] sm:$0xff]
    %v31 = vld [vmem:[%s1] sm:$0xff]
    %v32 = vadd.f32 %v29, %v30
    %33 = vadd.xlane.f32.xlu0 %v32
    %v34 = vpop.xlane.xlu0 %33
    %v35 = vadd.f32 %v31, %v34
    %vm36 = vcmask 7168
    %37 = vst.msk [vmem:[%s1] sm:$0xff] %vm36, %v35
    %v38 = vld [vmem:[%s2] sm:$0xff]
    %v39 = vmul.f32 %v29, %v29
    %v40 = vmul.f32 %v30, %v30
    %v41 = vadd.f32 %v39, %v40
    %42 = vadd.xlane.f32.xlu0 %v41
    %v43 = vpop.xlane.xlu0 %42
    %v44 = vadd.f32 %v38, %v43
    %45 = vst.msk [vmem:[%s2] sm:$0xff] %vm36, %v44
    // Predicated region
    $region14: #{tpu_custom_call.1} parent=1 // pred_check
      _
    $region15: #{tpu_custom_call.1} parent=1 // pred_check_branch
      %47 = sbr.rel (0) target = $region17
    $region16: #{tpu_custom_call.1} parent=1 // pred_region
      _
    $region17: #{tpu_custom_call.1} parent=1 // pred_fallthru
      _
    // Predicated region
    $region18: #{tpu_custom_call.1} parent=1 // pred_check
      _
    $region19: #{tpu_custom_call.1} parent=1 // pred_check_branch
      %49 = sbr.rel (0) target = $region21
    $region20: #{tpu_custom_call.1} parent=1 // pred_region
      _
    $region21: #{tpu_custom_call.1} parent=1 // pred_fallthru
      _
    // Predicated region
    $region22: #{tpu_custom_call.1} parent=1 // pred_check
      _
    $region23: #{tpu_custom_call.1} parent=1 // pred_check_branch
      %51 = sbr.rel (0) target = $region25
    $region24: #{tpu_custom_call.1} parent=1 // pred_region
      _
    $region25: #{tpu_custom_call.1} parent=1 // pred_fallthru
      _
    // Predicated region
    $region26: #{tpu_custom_call.1} parent=1 // pred_check
      _
    $region27: #{tpu_custom_call.1} parent=1 // pred_check_branch
      %53 = sbr.rel (0) target = $region29
    $region28: #{tpu_custom_call.1} parent=1 // pred_region
      _
    $region29: #{tpu_custom_call.1} parent=1 // pred_fallthru
      _
    %54 = vsyncpa [#allocation3], 1

</llo_original>
